<compile_context>
chip_gen: v6e
topology: v6e:2x2x1
jax: 0.10.0
libtpu: 0.0.40
codegen_flags: <defaults>
</compile_context>

<pallas_src>
import jax
import jax.numpy as jnp
from jax.experimental import pallas as pl
from jax.experimental.pallas import tpu as pltpu


def _round_up(x: int, m: int) -> int:
    return -(-x // m) * m


def _pick_tile(dim: int, max_tile: int, align: int) -> int:
    """Largest (<= max_tile) align-multiple tile minimizing padding waste."""
    dim_a = _round_up(dim, align)
    if dim_a <= max_tile:
        return dim_a
    n_tiles = pl.cdiv(dim_a, max_tile)
    return _round_up(pl.cdiv(dim, n_tiles), align)


def _output_sl_kernel(gamma_ref, h_ref, d_ref, v_ref, gd_ref, acc_ref, gd_acc_ref):
    j = pl.program_id(1)
    k = pl.program_id(2)
    nk = pl.num_programs(2)

    @pl.when(k == 0)
    def _init():
        acc_ref[...] = jnp.zeros_like(acc_ref)
        gd_acc_ref[...] = jnp.zeros_like(gd_acc_ref)

    gamma = gamma_ref[...]                                   # (tb, tk)

    # V accumulation: subtract so the negation is folded into the accumulate,
    # no extra VPU pass over the (tb, tn) tile at the end.
    acc_ref[...] -= jnp.dot(gamma, h_ref[...],
                            preferred_element_type=jnp.float32)

    # gd = gamma @ d as a VPU multiply + cross-lane (XLU) reduce; computed
    # only on the j==0 column of the grid (avoids redundant per-N-tile work).
    @pl.when(j == 0)
    def _gd_acc():
        d_row = d_ref[...]                                   # (1, tk)
        gd_acc_ref[...] += jnp.sum(
            gamma.astype(jnp.float32) * d_row.astype(jnp.float32),
            axis=-1, keepdims=True)                          # (tb, 1)

    @pl.when(k == nk - 1)
    def _finalize():
        v_ref[...] = acc_ref[...].astype(v_ref.dtype)        # lane-dense (tb, tn)
        # j>0 slots receive zeros (never read); keeps output blocks disjoint
        # across the parallel grid axes for megacore safety.
        gd_ref[...] = gd_acc_ref[...].astype(gd_ref.dtype)


def output_sl_forward(gamma, H, d, *,
                      tb_max: int = 256, tn_max: int = 1024, tk_max: int = 1024,
                      min_pallas_elems: int = 1 << 18,
                      force_pallas: bool = False):
    """Pallas equivalent of Output_SL.forward().

    gamma: (B, M), H: (M, N), d: (M,)
    returns (V: (B, N), zeros: (B,) float32, gd: (B,))
    """
    B, M = gamma.shape
    Mh, N = H.shape
    assert M == Mh and d.shape == (M,)
    out_dtype = gamma.dtype

    zeros = jnp.zeros((B,), dtype=jnp.float32)   # trivial glue, stays in JAX

    # Small problems: pallas_call / grid-step overhead dominates; let XLA fuse.
    if (B * M * N < min_pallas_elems) and not force_pallas:
        V = -(gamma @ H)
        gd = gamma @ d
        return V.astype(out_dtype), zeros, gd.astype(out_dtype)

    # (8, 128)-aligned, padding-balanced tile sizes.  Worst-case working set
    # with double buffering (tb=256, tn=tk=1024, f32) is ~13 MiB << 32 MiB.
    tb = _pick_tile(B, tb_max, 8)
    tn = _pick_tile(N, tn_max, 128)
    tk = _pick_tile(M, tk_max, 128)
    Bp, Np, Mp = _round_up(B, tb), _round_up(N, tn), _round_up(M, tk)

    # Zero-pad to tile multiples (no-op when already aligned); zero padding
    # contributes nothing to either contraction.
    if (Bp, Mp) != (B, M):
        gamma = jnp.pad(gamma, ((0, Bp - B), (0, Mp - M)))
    if (Mp, Np) != (M, N):
        H = jnp.pad(H, ((0, Mp - M), (0, Np - N)))
    d_row = jnp.pad(d, (0, Mp - M)).reshape(1, Mp)

    nb, nn, nk = Bp // tb, Np // tn, Mp // tk

    itemsize = jnp.dtype(gamma.dtype).itemsize
    cost = pl.CostEstimate(
        flops=2 * B * M * N + 2 * B * M,
        transcendentals=0,
        bytes_accessed=itemsize * (B * M + M * N + M + B * N + B),
    )

    grid_spec = pltpu.PrefetchScalarGridSpec(
        num_scalar_prefetch=0,
        grid=(nb, nn, nk),
        in_specs=[
            pl.BlockSpec((tb, tk), lambda i, j, k: (i, k)),    # gamma
            pl.BlockSpec((tk, tn), lambda i, j, k: (k, j)),    # H (streamed)
            pl.BlockSpec((1, tk), lambda i, j, k: (0, k)),     # d as a row
        ],
        out_specs=(
            pl.BlockSpec((tb, tn), lambda i, j, k: (i, j)),           # V
            pl.BlockSpec((None, tb, 1), lambda i, j, k: (j, i, 0)),   # gd, j-disjoint
        ),
        scratch_shapes=[
            pltpu.VMEM((tb, tn), jnp.float32),   # V accumulator
            pltpu.VMEM((tb, 1), jnp.float32),    # gd accumulator
        ],
    )

    v_p, gd_p = pl.pallas_call(
        _output_sl_kernel,
        out_shape=(
            jax.ShapeDtypeStruct((Bp, Np), out_dtype),
            jax.ShapeDtypeStruct((nn, Bp, 1), out_dtype),
        ),
        grid_spec=grid_spec,
        compiler_params=pltpu.CompilerParams(
            dimension_semantics=("parallel", "parallel", "arbitrary"),
            vmem_limit_bytes=32 * 1024 * 1024,
        ),
        cost_estimate=cost,
    )(gamma, H, d_row)

    V = v_p[:B, :N]
    gd = gd_p[0, :B, 0]   # slot j==0 holds the real gd
    return V, zeros, gd


if __name__ == "__main__":
    key = jax.random.PRNGKey(0)
    k_h, k_d, k_g, k_h2, k_d2, k_g2 = jax.random.split(key, 6)

    # Small shapes consistent with the module: num_batches B = 2, H: (8, 16).
    B, M, N = 2, 8, 16
    H = jax.random.normal(k_h, (M, N), dtype=jnp.float32)
    d = jax.random.normal(k_d, (M,), dtype=jnp.float32)
    gamma = jax.random.uniform(k_g, (B, M), dtype=jnp.float32)  # reset_parameters: rand

    V, z, gd = output_sl_forward(gamma, H, d, force_pallas=True)
    jax.block_until_ready((V, z, gd))

    V_ref = (-(H.T @ gamma.T)).T
    gd_ref = gamma @ d
    assert V.shape == (B, N) and z.shape == (B,) and gd.shape == (B,)
    assert jnp.allclose(V, V_ref, atol=1e-5, rtol=1e-5)
    assert jnp.allclose(gd, gd_ref, atol=1e-5, rtol=1e-5)
    assert jnp.all(z == 0)

    # Larger, non-tile-aligned case exercising the multi-tile pipelined path
    # (grid = (1, 2, 2): j- and k-tiling, padding, accumulation, j>0 gd slots).
    B2, M2, N2 = 10, 1200, 1500
    H2 = jax.random.normal(k_h2, (M2, N2), dtype=jnp.float32)
    d2 = jax.random.normal(k_d2, (M2,), dtype=jnp.float32)
    gamma2 = jax.random.uniform(k_g2, (B2, M2), dtype=jnp.float32)

    V2, z2, gd2 = output_sl_forward(gamma2, H2, d2)
    jax.block_until_ready((V2, z2, gd2))

    def _rel_err(a, b):
        return jnp.linalg.norm(a - b) / (jnp.linalg.norm(b) + 1e-12)

    assert V2.shape == (B2, N2) and z2.shape == (B2,) and gd2.shape == (B2,)
    assert _rel_err(V2, -(gamma2 @ H2)) < 2e-2
    assert _rel_err(gd2, gamma2 @ d2) < 2e-2
    assert jnp.all(z2 == 0)

    print("KERNEL_OK")
</pallas_src>

<mosaic_0001>
module attributes {stable_mosaic.version = 11 : i64} {
  func.func @_output_sl_kernel(%arg0: i32, %arg1: i32, %arg2: i32, %arg3: memref<8x128xf32, #tpu.memory_space<vmem>>, %arg4: memref<128x128xf32, #tpu.memory_space<vmem>>, %arg5: memref<1x128xf32, #tpu.memory_space<vmem>>, %arg6: memref<8x128xf32, #tpu.memory_space<vmem>>, %arg7: memref<1x8x1xf32, #tpu.memory_space<vmem>>, %arg8: memref<8x128xf32, #tpu.memory_space<vmem>>, %arg9: memref<8x1xf32, #tpu.memory_space<vmem>>) attributes {dimension_semantics = [#tpu.dimension_semantics<parallel>, #tpu.dimension_semantics<parallel>, #tpu.dimension_semantics<arbitrary>], iteration_bounds = array<i64: 1, 1, 1>, scalar_prefetch = 0 : i64, scratch_operands = 2 : i64, tpu.core_type = #tpu.core_type<tc>, window_params = [{transform_indices = @transform_0, window_bounds = array<i64: 8, 128>}, {transform_indices = @transform_1, window_bounds = array<i64: 128, 128>}, {transform_indices = @transform_2, window_bounds = array<i64: 1, 128>}, {transform_indices = @transform_3, window_bounds = array<i64: 8, 128>}, {transform_indices = @transform_4, window_bounds = array<i64: 1, 8, 1>}]} {
    %c0_i32 = arith.constant 0 : i32
    %0 = arith.cmpi eq, %arg2, %c0_i32 : i32
    %1 = arith.extui %0 : i1 to i32
    %c0_i32_0 = arith.constant 0 : i32
    %2 = arith.cmpi ne, %1, %c0_i32_0 : i32
    scf.if %2 {
      %cst_12 = arith.constant 0.000000e+00 : f32
      %15 = vector.broadcast %cst_12 : f32 to vector<8x128xf32>
      %c0_13 = arith.constant 0 : index
      %c0_14 = arith.constant 0 : index
      %16 = vector.load %arg8[%c0_13, %c0_14] : memref<8x128xf32, #tpu.memory_space<vmem>>, vector<8x128xf32>
      tpu.vector_store %arg8[%c0_13, %c0_14], %15 {strides = array<i32>} : memref<8x128xf32, #tpu.memory_space<vmem>>, vector<8x128xf32>,
      %cst_15 = arith.constant 0.000000e+00 : f32
      %17 = vector.broadcast %cst_15 : f32 to vector<8x1xf32>
      %c0_16 = arith.constant 0 : index
      %c0_17 = arith.constant 0 : index
      %18 = vector.load %arg9[%c0_16, %c0_17] : memref<8x1xf32, #tpu.memory_space<vmem>>, vector<8x1xf32>
      tpu.vector_store %arg9[%c0_16, %c0_17], %17 {strides = array<i32>} : memref<8x1xf32, #tpu.memory_space<vmem>>, vector<8x1xf32>,
    } else {
    }
    %c0 = arith.constant 0 : index
    %c0_1 = arith.constant 0 : index
    %3 = vector.load %arg3[%c0, %c0_1] : memref<8x128xf32, #tpu.memory_space<vmem>>, vector<8x128xf32>
    %c0_2 = arith.constant 0 : index
    %c0_3 = arith.constant 0 : index
    %4 = vector.load %arg8[%c0_2, %c0_3] : memref<8x128xf32, #tpu.memory_space<vmem>>, vector<8x128xf32>
    %c0_4 = arith.constant 0 : index
    %c0_5 = arith.constant 0 : index
    %5 = vector.load %arg4[%c0_4, %c0_5] : memref<128x128xf32, #tpu.memory_space<vmem>>, vector<128x128xf32>
    %cst = arith.constant dense<0.000000e+00> : vector<8x128xf32>
    %6 = tpu.matmul %3, %5, %cst {dimension_numbers = #tpu.dot_dimension_numbers<[1], [0], [0], [1], [0, 0, 1, 1], [], []>} : vector<8x128xf32>, vector<128x128xf32>, vector<8x128xf32> -> vector<8x128xf32>
    %7 = arith.subf %4, %6 : vector<8x128xf32>
    %c0_6 = arith.constant 0 : index
    %c0_7 = arith.constant 0 : index
    %8 = vector.load %arg8[%c0_6, %c0_7] : memref<8x128xf32, #tpu.memory_space<vmem>>, vector<8x128xf32>
    tpu.vector_store %arg8[%c0_6, %c0_7], %7 {strides = array<i32>} : memref<8x128xf32, #tpu.memory_space<vmem>>, vector<8x128xf32>,
    %c0_i32_8 = arith.constant 0 : i32
    %9 = arith.cmpi eq, %arg1, %c0_i32_8 : i32
    %10 = arith.extui %9 : i1 to i32
    %c0_i32_9 = arith.constant 0 : i32
    %11 = arith.cmpi ne, %10, %c0_i32_9 : i32
    scf.if %11 {
      %c0_12 = arith.constant 0 : index
      %c0_13 = arith.constant 0 : index
      %15 = vector.load %arg5[%c0_12, %c0_13] : memref<1x128xf32, #tpu.memory_space<vmem>>, vector<1x128xf32>
      %c0_14 = arith.constant 0 : index
      %c0_15 = arith.constant 0 : index
      %16 = vector.load %arg9[%c0_14, %c0_15] : memref<8x1xf32, #tpu.memory_space<vmem>>, vector<8x1xf32>
      %17 = vector.broadcast %15 : vector<1x128xf32> to vector<8x128xf32>
      %18 = arith.mulf %3, %17 : vector<8x128xf32>
      %cst_16 = arith.constant dense<0.000000e+00> : vector<8xf32>
      %19 = vector.multi_reduction <add>, %18, %cst_16 [1] : vector<8x128xf32> to vector<8xf32>
      %20 = vector.shape_cast %19 : vector<8xf32> to vector<8x1xf32>
      %21 = arith.addf %16, %20 : vector<8x1xf32>
      %c0_17 = arith.constant 0 : index
      %c0_18 = arith.constant 0 : index
      %22 = vector.load %arg9[%c0_17, %c0_18] : memref<8x1xf32, #tpu.memory_space<vmem>>, vector<8x1xf32>
      tpu.vector_store %arg9[%c0_17, %c0_18], %21 {strides = array<i32>} : memref<8x1xf32, #tpu.memory_space<vmem>>, vector<8x1xf32>,
    } else {
    }
    %c0_i32_10 = arith.constant 0 : i32
    %12 = arith.cmpi eq, %arg2, %c0_i32_10 : i32
    %13 = arith.extui %12 : i1 to i32
    %c0_i32_11 = arith.constant 0 : i32
    %14 = arith.cmpi ne, %13, %c0_i32_11 : i32
    scf.if %14 {
      %c0_12 = arith.constant 0 : index
      %c0_13 = arith.constant 0 : index
      %15 = vector.load %arg8[%c0_12, %c0_13] : memref<8x128xf32, #tpu.memory_space<vmem>>, vector<8x128xf32>
      %c0_14 = arith.constant 0 : index
      %c0_15 = arith.constant 0 : index
      %16 = vector.load %arg6[%c0_14, %c0_15] : memref<8x128xf32, #tpu.memory_space<vmem>>, vector<8x128xf32>
      tpu.vector_store %arg6[%c0_14, %c0_15], %15 {strides = array<i32>} : memref<8x128xf32, #tpu.memory_space<vmem>>, vector<8x128xf32>,
      %c0_16 = arith.constant 0 : index
      %c0_17 = arith.constant 0 : index
      %17 = vector.load %arg9[%c0_16, %c0_17] : memref<8x1xf32, #tpu.memory_space<vmem>>, vector<8x1xf32>
      %c0_18 = arith.constant 0 : index
      %c0_19 = arith.constant 0 : index
      %c0_20 = arith.constant 0 : index
      %18 = vector.load %arg7[%c0_18, %c0_19, %c0_20] : memref<1x8x1xf32, #tpu.memory_space<vmem>>, vector<1x8x1xf32>
      %19 = vector.shape_cast %18 : vector<1x8x1xf32> to vector<8x1xf32>
      %20 = vector.shape_cast %17 : vector<8x1xf32> to vector<1x8x1xf32>
      tpu.vector_store %arg7[%c0_18, %c0_19, %c0_20], %20 {strides = array<i32>} : memref<1x8x1xf32, #tpu.memory_space<vmem>>, vector<1x8x1xf32>,
    } else {
    }
    return
  }
  func.func @transform_0(%arg0: i32, %arg1: i32, %arg2: i32) -> (i32, i32) {
    %c0_i32 = arith.constant 0 : i32
    return %arg0, %arg2 : i32, i32
  }
  func.func @transform_1(%arg0: i32, %arg1: i32, %arg2: i32) -> (i32, i32) {
    %c0_i32 = arith.constant 0 : i32
    return %arg2, %arg1 : i32, i32
  }
  func.func @transform_2(%arg0: i32, %arg1: i32, %arg2: i32) -> (i32, i32) {
    %c0_i32 = arith.constant 0 : i32
    %c0_i32_0 = arith.constant 0 : i32
    return %c0_i32, %arg2 : i32, i32
  }
  func.func @transform_3(%arg0: i32, %arg1: i32, %arg2: i32) -> (i32, i32) {
    %c0_i32 = arith.constant 0 : i32
    return %arg0, %arg1 : i32, i32
  }
  func.func @transform_4(%arg0: i32, %arg1: i32, %arg2: i32) -> (i32, i32, i32) {
    %c0_i32 = arith.constant 0 : i32
    %c0_i32_0 = arith.constant 0 : i32
    return %arg1, %arg0, %c0_i32 : i32, i32, i32
  }
}

</mosaic_0001>

<llo_original>
// kernel: tpu_custom_call.1
$region0: #{tpu_custom_call.1}
  #allocation0 [shape = 'u32[]', space=smem, size = 0x4, offset = 0x4, fixed_abs, tag = 'smem constant byte address 0x4 - core index']
  #allocation1 [shape = 'u32[144,128]{1,0:T(1,128)}', space=vmem, size = 0x12000, scoped, tag = 'internal scratch']
  #allocation2 [shape = 'f32[8,128]{1,0:T(8,128)}', space=vmem, size = 0x1000, scoped, tag = 'scratch operand']
  #allocation3 [shape = 'f32[8,1]{1,0:T(8,128)}', space=vmem, size = 0x1000, scoped, tag = 'scratch operand']
  %s0 = inlined_call_operand.hbm [shape: f32[8,128], index: 0, kind: input, shape index: {}]
  %s1 = inlined_call_operand.hbm [shape: f32[128,128], index: 1, kind: input, shape index: {}]
  %s2 = inlined_call_operand.vmem [shape: f32[1,128], index: 2, kind: input, shape index: {}]
  %s3 = inlined_call_operand.hbm [shape: f32[8,128], index: 3, kind: output, shape index: {0}]
  %s4 = inlined_call_operand.vmem [shape: f32[1,8,1], index: 4, kind: output, shape index: {1}]
  %5 = xla_tuple %s3, %s4
  %s6 = sld [smem:[#allocation0]]
  $region50: #{tpu_custom_call.1} parent=0
    _
  %s8 = ssub.s32 1, %s6
  %s9 = scalar_select 0, %s8, %s6
  $region1: #{tpu_custom_call.1} parent=0
    #allocation4 [shape = 'u8[4096]{0}', space=vmem, size = 0x1000, scoped, tag = 'input window, operand 0, single buffered']
    #allocation5 [shape = 's32[1]{0}', space=sflag, size = 0x4, scoped, tag = 'scoped memory for tpu_custom_call.1']
    #allocation6 [shape = 's32[1]{0}', space=sflag, size = 0x4, scoped, tag = 'scoped memory for tpu_custom_call.1']
    #allocation7 [shape = 'u8[65536]{0}', space=vmem, size = 0x10000, scoped, tag = 'input window, operand 1, single buffered']
    #allocation8 [shape = 's32[1]{0}', space=sflag, size = 0x4, scoped, tag = 'scoped memory for tpu_custom_call.1']
    #allocation9 [shape = 'u8[4096]{0}', space=vmem, size = 0x1000, scoped, tag = 'output window, operand 0, single buffered']
    %10 = vsyncpa [#allocation5], 0
    %11 = vsyncpa [#allocation8], 0
    %12 = vsyncpa [#allocation6], 0
    // Predicated region
    $region2: #{tpu_custom_call.1} parent=1 // pred_check
      _
    $region3: #{tpu_custom_call.1} parent=1 // pred_check_branch
      %14 = sbr.rel (0) target = $region5
    $region4: #{tpu_custom_call.1} parent=1 // pred_region
      %s16 = ssub.s32 128, 128
      %17 = vsyncadd [#allocation5], %s16
      %s19 = sshll.u32 [#allocation4], 4
      %s20 = int_to_ptr.vmem [resolvable:$true] %s19
      %22 = dma.hbm_to_vmem [thread:$0]  %s0, 128, %s20, [#allocation5]
    $region5: #{tpu_custom_call.1} parent=1 // pred_fallthru
      _
    // Predicated region
    $region6: #{tpu_custom_call.1} parent=1 // pred_check
      _
    $region7: #{tpu_custom_call.1} parent=1 // pred_check_branch
      %24 = sbr.rel (0) target = $region9
    $region8: #{tpu_custom_call.1} parent=1 // pred_region
      %s26 = ssub.s32 2048, 2048
      %27 = vsyncadd [#allocation8], %s26
      %s28 = sshll.u32 [#allocation7], 4
      %s29 = int_to_ptr.vmem [resolvable:$true] %s28
      %34 = dma.hbm_to_vmem [thread:$0]  %s1, 2048, %s29, [#allocation8], 128, 128, 8
    $region9: #{tpu_custom_call.1} parent=1 // pred_fallthru
      _
    // Predicated region
    $region10: #{tpu_custom_call.1} parent=1 // pred_check
      _
    $region11: #{tpu_custom_call.1} parent=1 // pred_check_branch
      %36 = sbr.rel (0) target = $region13
    $region12: #{tpu_custom_call.1} parent=1 // pred_region
      _
    $region13: #{tpu_custom_call.1} parent=1 // pred_fallthru
      _
    // Predicated region
    $region14: #{tpu_custom_call.1} parent=1 // pred_check
      _
    $region15: #{tpu_custom_call.1} parent=1 // pred_check_branch
      %38 = sbr.rel (0) target = $region17
    $region16: #{tpu_custom_call.1} parent=1 // pred_region
      %39 = dma.done [#allocation5], 128
    $region17: #{tpu_custom_call.1} parent=1 // pred_fallthru
      _
    // Predicated region
    $region18: #{tpu_custom_call.1} parent=1 // pred_check
      _
    $region19: #{tpu_custom_call.1} parent=1 // pred_check_branch
      %41 = sbr.rel (0) target = $region21
    $region20: #{tpu_custom_call.1} parent=1 // pred_region
      %42 = dma.done [#allocation8], 2048
    $region21: #{tpu_custom_call.1} parent=1 // pred_fallthru
      _
    %p43 = scmp.eq.s32.totalorder 0, 0
    // Predicated region
    $region22: #{tpu_custom_call.1} parent=1 // pred_check
      %p44 = pneg %p43
    $region23: #{tpu_custom_call.1} parent=1 // pred_check_branch
      %46 = sbr.rel (%p44) target = $region25
    $region24: #{tpu_custom_call.1} parent=1 // pred_region
      %47 = vst [vmem:[#allocation2] sm:$0xff] 0.0
      %vm48 = vcmask 7168
      %49 = vst.msk [vmem:[#allocation3] sm:$0xff] %vm48, 0.0
    $region25: #{tpu_custom_call.1} parent=1 // pred_fallthru
      _
    %v50 = vld [vmem:[#allocation4] sm:$0xff]
    %v51 = vld [vmem:[#allocation2] sm:$0xff]
    %v52 = vld [vmem:[#allocation7] sm:$0xff]
    %v53 = vld [vmem:[#allocation7 + $0x8] sm:$0xff]
    %v54 = vld [vmem:[#allocation7 + $0x10] sm:$0xff]
    %v55 = vld [vmem:[#allocation7 + $0x18] sm:$0xff]
    %v56 = vld [vmem:[#allocation7 + $0x20] sm:$0xff]
    %v57 = vld [vmem:[#allocation7 + $0x28] sm:$0xff]
    %v58 = vld [vmem:[#allocation7 + $0x30] sm:$0xff]
    %v59 = vld [vmem:[#allocation7 + $0x38] sm:$0xff]
    %v60 = vld [vmem:[#allocation7 + $0x40] sm:$0xff]
    %v61 = vld [vmem:[#allocation7 + $0x48] sm:$0xff]
    %v62 = vld [vmem:[#allocation7 + $0x50] sm:$0xff]
    %v63 = vld [vmem:[#allocation7 + $0x58] sm:$0xff]
    %v64 = vld [vmem:[#allocation7 + $0x60] sm:$0xff]
    %v65 = vld [vmem:[#allocation7 + $0x68] sm:$0xff]
    %v66 = vld [vmem:[#allocation7 + $0x70] sm:$0xff]
    %v67 = vld [vmem:[#allocation7 + $0x78] sm:$0xff]
    %68 = vmatprep.subr.mxu0 0.0
    %69 = vmatpush1.msra.mxu0 %v67
    %70 = vmatprep.subr.mxu0 0.0
    %71 = vmatpush1.msra.mxu0 %v66
    %72 = vmatprep.subr.mxu0 0.0
    %73 = vmatpush1.msra.mxu0 %v65
    %74 = vmatprep.subr.mxu0 0.0
    %75 = vmatpush1.msra.mxu0 %v64
    %76 = vmatprep.subr.mxu0 0.0
    %77 = vmatpush1.msra.mxu0 %v63
    %78 = vmatprep.subr.mxu0 0.0
    %79 = vmatpush1.msra.mxu0 %v62
    %80 = vmatprep.subr.mxu0 0.0
    %81 = vmatpush1.msra.mxu0 %v61
    %82 = vmatprep.subr.mxu0 0.0
    %83 = vmatpush1.msra.mxu0 %v60
    %84 = vmatprep.subr.mxu0 0.0
    %85 = vmatpush1.msra.mxu0 %v59
    %86 = vmatprep.subr.mxu0 0.0
    %87 = vmatpush1.msra.mxu0 %v58
    %88 = vmatprep.subr.mxu0 0.0
    %89 = vmatpush1.msra.mxu0 %v57
    %90 = vmatprep.subr.mxu0 0.0
    %91 = vmatpush1.msra.mxu0 %v56
    %92 = vmatprep.subr.mxu0 0.0
    %93 = vmatpush1.msra.mxu0 %v55
    %94 = vmatprep.subr.mxu0 0.0
    %95 = vmatpush1.msra.mxu0 %v54
    %96 = vmatprep.subr.mxu0 0.0
    %97 = vmatpush1.msra.mxu0 %v53
    %98 = vmatprep.subr.mxu0 0.0
    %99 = vmatpush1.msra.mxu0 %v52
    %100 = vmatprep.subr.mxu0 0.0
    %101 = vmatpush2.msra.mxu0 0.0
    %102 = vmatprep.subr.mxu0 0.0
    %103 = vmatpush2.msra.mxu0 0.0
    %104 = vmatprep.subr.mxu0 0.0
    %105 = vmatpush2.msra.mxu0 0.0
    %106 = vmatprep.subr.mxu0 0.0
    %107 = vmatpush2.msra.mxu0 0.0
    %108 = vmatprep.subr.mxu0 0.0
    %109 = vmatpush2.msra.mxu0 0.0
    %110 = vmatprep.subr.mxu0 0.0
    %111 = vmatpush2.msra.mxu0 0.0
    %112 = vmatprep.subr.mxu0 0.0
    %113 = vmatpush2.msra.mxu0 0.0
    %114 = vmatprep.subr.mxu0 0.0
    %115 = vmatpush2.msra.mxu0 0.0
    %116 = vmatprep.subr.mxu0 0.0
    %117 = vmatpush2.msra.mxu0 0.0
    %118 = vmatprep.subr.mxu0 0.0
    %119 = vmatpush2.msra.mxu0 0.0
    %120 = vmatprep.subr.mxu0 0.0
    %121 = vmatpush2.msra.mxu0 0.0
    %122 = vmatprep.subr.mxu0 0.0
    %123 = vmatpush2.msra.mxu0 0.0
    %124 = vmatprep.subr.mxu0 0.0
    %125 = vmatpush2.msra.mxu0 0.0
    %126 = vmatprep.subr.mxu0 0.0
    %127 = vmatpush2.msra.mxu0 0.0
    %128 = vmatprep.subr.mxu0 0.0
    %129 = vmatpush2.msra.mxu0 0.0
    %130 = vmatprep.subr.mxu0 0.0
    %131 = vmatpush2.msra.mxu0 0.0
    %132 = vmatprep.mubr.f32.mxu0 0.0
    %133 = vmatmul.mubr.f32.gmra.mxu0 %v50
    %v134 = vpop.f32.mrf.mxu0
    %v135 = vadd.f32 0.0, %v134
    %v136 = vpop.f32.mrf.mxu0
    %137 = vdwg.mxu0
    %v138 = vsub.f32 %v51, %v135
    %139 = vst [vmem:[#allocation2] sm:$0xff] %v138
    %p140 = scmp.eq.s32.totalorder 0, 0
    // Predicated region
    $region26: #{tpu_custom_call.1} parent=1 // pred_check
      %p141 = pneg %p140
    $region27: #{tpu_custom_call.1} parent=1 // pred_check_branch
      %143 = sbr.rel (%p141) target = $region29
    $region28: #{tpu_custom_call.1} parent=1 // pred_region
      %v144 = vld [vmem:[%s2] sm:$0x1]
      %v145 = vld [vmem:[#allocation3] sm:$0xff]
      %v147 = vlaneseq
      %v148 = vshrl.u32 %v147, 7
      %v149 = vsub.s32 0, %v148
      %v150 = vrot.slane %v144, %v149
      %v152 = vmul.f32 %v50, %v150
      %153 = vadd.xlane.f32.xlu0 %v152
      %v154 = vpop.xlane.xlu0 %153
      %v155 = vadd.f32 %v145, %v154
      %vm156 = vcmask 7168
      %157 = vst.msk [vmem:[#allocation3] sm:$0xff] %vm156, %v155
    $region29: #{tpu_custom_call.1} parent=1 // pred_fallthru
      _
    // Predicated region
    $region30: #{tpu_custom_call.1} parent=1 // pred_check
      %p158 = pneg %p43
    $region31: #{tpu_custom_call.1} parent=1 // pred_check_branch
      %160 = sbr.rel (%p158) target = $region33
    $region32: #{tpu_custom_call.1} parent=1 // pred_region
      %v161 = vld [vmem:[#allocation2] sm:$0xff]
      %162 = vst [vmem:[#allocation9] sm:$0xff] %v161
      %v163 = vld [vmem:[#allocation3] sm:$0xff]
      %vm164 = vcmask 7168
      %165 = vst.msk [vmem:[%s4] sm:$0xff] %vm164, %v163
    $region33: #{tpu_custom_call.1} parent=1 // pred_fallthru
      _
    // Predicated region
    $region34: #{tpu_custom_call.1} parent=1 // pred_check
      _
    $region35: #{tpu_custom_call.1} parent=1 // pred_check_branch
      %167 = sbr.rel (0) target = $region37
    $region36: #{tpu_custom_call.1} parent=1 // pred_region
      %s169 = ssub.s32 128, 128
      %170 = vsyncadd [#allocation6], %s169
      %s172 = sshll.u32 [#allocation9], 4
      %s173 = int_to_ptr.vmem [resolvable:$true] %s172
      %175 = dma.vmem_to_hbm [thread:$0]  %s173, 128, %s3, [#allocation6]
    $region37: #{tpu_custom_call.1} parent=1 // pred_fallthru
      _
    // Predicated region
    $region38: #{tpu_custom_call.1} parent=1 // pred_check
      _
    $region39: #{tpu_custom_call.1} parent=1 // pred_check_branch
      %177 = sbr.rel (0) target = $region41
    $region40: #{tpu_custom_call.1} parent=1 // pred_region
      _
    $region41: #{tpu_custom_call.1} parent=1 // pred_fallthru
      _
    // Predicated region
    $region42: #{tpu_custom_call.1} parent=1 // pred_check
      _
    $region43: #{tpu_custom_call.1} parent=1 // pred_check_branch
      %179 = sbr.rel (0) target = $region45
    $region44: #{tpu_custom_call.1} parent=1 // pred_region
      %180 = dma.done [#allocation6], 128
    $region45: #{tpu_custom_call.1} parent=1 // pred_fallthru
      _
    // Predicated region
    $region46: #{tpu_custom_call.1} parent=1 // pred_check
      _
    $region47: #{tpu_custom_call.1} parent=1 // pred_check_branch
      %182 = sbr.rel (0) target = $region49
    $region48: #{tpu_custom_call.1} parent=1 // pred_region
      _
    $region49: #{tpu_custom_call.1} parent=1 // pred_fallthru
      _
    %183 = vsyncpa [#allocation5], 1
    %184 = vsyncpa [#allocation8], 1
    %185 = vsyncpa [#allocation6], 1

</llo_original>
